<compile_context>
chip_gen: v7x
topology: tpu7x:2x2x1
jax: 0.10.0
libtpu: 0.0.40
codegen_flags: <defaults>
</compile_context>

<pallas_src>
import math
import jax
import jax.numpy as jnp
from jax.experimental import pallas as pl
from jax.experimental.pallas import tpu as pltpu

GELU_C = math.sqrt(2.0 / math.pi)


def _round_up(a, b):
    return (a + b - 1) // b * b


def _device_kind():
    try:
        return jax.devices()[0].device_kind.lower()
    except Exception:
        return ""


def _pick_tnf(nf_p, target):
    """Largest multiple-of-128 divisor of nf_p that is <= target."""
    target = max(128, min(target, nf_p) // 128 * 128)
    for c in range(target, 127, -128):
        if nf_p % c == 0:
            return c
    return 128


def _make_mlp_kernel(*, resident, tnf, gelu_dtype, single_step):
    """Build the fused kernel body.

    resident: weights live as full-array VMEM residents (fetched once for the
              whole grid) and the per-nf-step slab is sliced with pl.ds.
    streamed: the pipeline delivers (nx_p, tnf) / (tnf, nx_p) weight slabs.
    """

    def _slabs(wfc_ref, bfc_ref, wproj_ref, j):
        if resident:
            off = pl.multiple_of(j * tnf, 128)
            return (wfc_ref[:, pl.ds(off, tnf)],
                    bfc_ref[:, pl.ds(off, tnf)],
                    wproj_ref[pl.ds(off, tnf), :])
        return wfc_ref[...], bfc_ref[...], wproj_ref[...]

    def _partial(x_ref, wfc_ref, bfc_ref, wproj_ref):
        j = pl.program_id(1)
        wfc, bfc, wproj = _slabs(wfc_ref, bfc_ref, wproj_ref, j)
        # Cast x to bf16 in-kernel (hidden under the MXU); f32 accumulation.
        xb = x_ref[...].astype(jnp.bfloat16)
        h = jnp.dot(xb, wfc, preferred_element_type=jnp.float32) + bfc
        # GPT-2 tanh GELU (bf16 on v6e/v7x, f32 on v5e which lacks bf16 VPU/EUP).
        h = h.astype(gelu_dtype)
        inner = GELU_C * h * (1.0 + 0.044715 * (h * h))
        h = 0.5 * h * (1.0 + jnp.tanh(inner))
        return jnp.dot(h.astype(jnp.bfloat16), wproj,
                       preferred_element_type=jnp.float32)

    if single_step:
        def kernel(x_ref, wfc_ref, bfc_ref, wproj_ref, bproj_ref, o_ref):
            part = _partial(x_ref, wfc_ref, bfc_ref, wproj_ref)
            o_ref[...] = (part + bproj_ref[...]).astype(o_ref.dtype)
        return kernel

    def kernel(x_ref, wfc_ref, bfc_ref, wproj_ref, bproj_ref, o_ref, acc_ref):
        j = pl.program_id(1)
        part = _partial(x_ref, wfc_ref, bfc_ref, wproj_ref)

        @pl.when(j == 0)
        def _():                      # first nf slab: overwrite, no zero-init
            acc_ref[...] = part

        @pl.when(j > 0)
        def _():
            acc_ref[...] += part

        @pl.when(j == pl.num_programs(1) - 1)
        def _():
            o_ref[...] = (acc_ref[...] + bproj_ref[...]).astype(o_ref.dtype)

    return kernel


def prepare_mlp_params(w_fc, b_fc, w_proj, b_proj):
    """One-time pad (lane-dense, 128-multiples) + bf16 cast of the Conv1D
    parameters, hoisted out of the per-call hot path."""
    nx, nf = w_fc.shape
    nx_p = _round_up(nx, 128)
    nf_p = _round_up(nf, 128)
    return {
        "nx": nx, "nf": nf, "nx_p": nx_p, "nf_p": nf_p,
        "w_fc": jnp.pad(w_fc.astype(jnp.bfloat16),
                        ((0, nx_p - nx), (0, nf_p - nf))),
        "b_fc": jnp.pad(b_fc.astype(jnp.float32),
                        (0, nf_p - nf)).reshape(1, nf_p),
        "w_proj": jnp.pad(w_proj.astype(jnp.bfloat16),
                          ((0, nf_p - nf), (0, nx_p - nx))),
        "b_proj": jnp.pad(b_proj.astype(jnp.float32),
                          (0, nx_p - nx)).reshape(1, nx_p),
    }


def mlp_forward(x, params):
    """x: (batch, seq, nx) f32/bf16; params from prepare_mlp_params."""
    batch, seq, nx = x.shape
    assert nx == params["nx"], "x feature dim does not match prepared weights"
    nx_p, nf_p, nf = params["nx_p"], params["nf_p"], params["nf"]
    M = batch * seq
    out_dtype = x.dtype
    out_isz = jnp.dtype(out_dtype).itemsize
    x_isz = jnp.dtype(x.dtype).itemsize

    kind = _device_kind()
    is_v7 = ("v7" in kind) or ("7x" in kind)
    is_v6 = "v6" in kind
    is_v5 = "v5" in kind
    n_cores = 2 if is_v7 else 1
    # Generation-aware VMEM cap (leave headroom for Mosaic internal scratch).
    vmem_cap = (52 << 20) if is_v7 else ((100 << 20) if (is_v5 or is_v6)
                                         else (64 << 20))
    gelu_dtype = jnp.bfloat16 if (is_v6 or is_v7) else jnp.float32

    # --- weight residency decision -------------------------------------------
    weight_bytes = 2 * nx_p * nf_p * 2          # both weights, bf16, one copy
    # Budget double-buffering conservatively; resident => exactly one HBM pass.
    resident = 2 * weight_bytes <= int(0.6 * vmem_cap)

    # --- tile selection -------------------------------------------------------
    if resident:
        tm_target, tnf_target = 256, 2048
    else:
        # Streamed weights: larger row tile to raise flops/weight-byte.
        tm_target = 512
        tnf_target = 512 if is_v7 else 1024
    tnf_eff = _pick_tnf(nf_p, tnf_target)
    n_nf = nf_p // tnf_eff
    single_step = (n_nf == 1)

    if M > tm_target:
        tm_eff = tm_target
    else:
        # Small M: split across the two v7x TensorCores when worthwhile and
        # keep row tiles >= 16 (bf16 packing granule feeding the MXU).
        n_split = n_cores if (n_cores > 1 and M >= 32) else 1
        tm_eff = _round_up(max(1, -(-M // n_split)), 16)
    M_p = _round_up(M, tm_eff)
    n_row = M_p // tm_eff

    # --- x: no bf16 copy in the wrapper; pad only if actually needed ---------
    x2 = x.reshape(M, nx)
    if (M_p, nx_p) != (M, nx):
        x2 = jnp.pad(x2, ((0, M_p - M), (0, nx_p - nx)))

    # --- VMEM budget ----------------------------------------------------------
    if resident:
        wbuf = 2 * weight_bytes + 2 * nf_p * 4 + 2 * nx_p * 4
    else:
        wbuf = (2 * nx_p * tnf_eff * 2 + 2 * tnf_eff * nx_p * 2
                + 2 * tnf_eff * 4 + 2 * nx_p * 4)
    vmem_est = (wbuf
                + 2 * tm_eff * nx_p * x_isz           # x tile (double-buffered)
                + 2 * tm_eff * nx_p * out_isz         # output tile
                + (0 if single_step else tm_eff * nx_p * 4)   # f32 accumulator
                + 2 * tm_eff * tnf_eff * 4)           # h intermediate headroom
    vmem_limit = int(min(max(vmem_est * 3 // 2, 32 << 20), vmem_cap))

    weight_passes = 1 if resident else n_row
    cost = pl.CostEstimate(
        flops=4 * M_p * nx_p * nf_p,                  # two matmuls
        transcendentals=M_p * nf_p,                   # one tanh / hidden elem
        bytes_accessed=(M_p * nx_p * x_isz            # x in
                        + M_p * nx_p * out_isz        # out
                        + weight_passes * weight_bytes
                        + (nf_p + nx_p) * 4),         # biases
    )

    if resident:
        w_specs = [
            pl.BlockSpec((nx_p, nf_p), lambda i, j: (0, 0)),     # w_fc resident
            pl.BlockSpec((1, nf_p), lambda i, j: (0, 0)),        # b_fc resident
            pl.BlockSpec((nf_p, nx_p), lambda i, j: (0, 0)),     # w_proj resident
        ]
    else:
        w_specs = [
            pl.BlockSpec((nx_p, tnf_eff), lambda i, j: (0, j)),  # w_fc slab
            pl.BlockSpec((1, tnf_eff), lambda i, j: (0, j)),     # b_fc slab
            pl.BlockSpec((tnf_eff, nx_p), lambda i, j: (j, 0)),  # w_proj slab
        ]
    in_specs = ([pl.BlockSpec((tm_eff, nx_p), lambda i, j: (i, 0))]   # x rows
                + w_specs
                + [pl.BlockSpec((1, nx_p), lambda i, j: (0, 0))])     # b_proj

    kernel = _make_mlp_kernel(resident=resident, tnf=tnf_eff,
                              gelu_dtype=gelu_dtype, single_step=single_step)

    out2d = pl.pallas_call(
        kernel,
        out_shape=jax.ShapeDtypeStruct((M_p, nx_p), out_dtype),
        grid_spec=pltpu.PrefetchScalarGridSpec(
            num_scalar_prefetch=0,
            grid=(n_row, n_nf),
            in_specs=in_specs,
            out_specs=pl.BlockSpec((tm_eff, nx_p), lambda i, j: (i, 0)),
            scratch_shapes=([] if single_step
                            else [pltpu.VMEM((tm_eff, nx_p), jnp.float32)]),
        ),
        compiler_params=pltpu.CompilerParams(
            dimension_semantics=("parallel", "arbitrary"),
            vmem_limit_bytes=vmem_limit,
        ),
        cost_estimate=cost,
    )(x2, params["w_fc"], params["b_fc"], params["w_proj"], params["b_proj"])

    out = out2d
    if (M_p, nx_p) != (M, nx):
        out = out[:M, :nx]
    return out.reshape(batch, seq, nx)


def _reference(x, w_fc, b_fc, w_proj, b_proj):
    h = jnp.dot(x, w_fc) + b_fc
    h = 0.5 * h * (1.0 + jnp.tanh(GELU_C * (h + 0.044715 * h ** 3)))
    return jnp.dot(h, w_proj) + b_proj


if __name__ == "__main__":
    # Small GPT-2-like config: n_embd=32, n_state=4*n_embd=128, batch=2, seq=8.
    batch, seq, nx = 2, 8, 32
    n_state = 4 * nx

    key = jax.random.PRNGKey(0)
    kx, kfc, kproj = jax.random.split(key, 3)

    x = jax.random.normal(kx, (batch, seq, nx), dtype=jnp.float32)
    # Conv1D init: weight ~ N(0, 0.02), bias = 0.
    w_fc = 0.02 * jax.random.normal(kfc, (nx, n_state), dtype=jnp.float32)
    b_fc = jnp.zeros((n_state,), dtype=jnp.float32)
    w_proj = 0.02 * jax.random.normal(kproj, (n_state, nx), dtype=jnp.float32)
    b_proj = jnp.zeros((nx,), dtype=jnp.float32)

    # One-time parameter prep (pad + bf16 cast), then the fused kernel call.
    params = prepare_mlp_params(w_fc, b_fc, w_proj, b_proj)
    out = mlp_forward(x, params)
    out = jax.block_until_ready(out)

    ref = _reference(x, w_fc, b_fc, w_proj, b_proj)
    assert out.shape == (batch, seq, nx)
    # bf16 matmul operands (f32 accumulation) => loosen tolerance vs f32 ref.
    assert jnp.allclose(out, ref, atol=1e-2, rtol=1e-2), float(
        jnp.max(jnp.abs(out - ref)))

    print("KERNEL_OK")
</pallas_src>

<mosaic_0001>
module attributes {stable_mosaic.version = 11 : i64} {
  func.func @kernel(%arg0: i32, %arg1: i32, %arg2: memref<16x128xf32, #tpu.memory_space<vmem>>, %arg3: memref<128x128xbf16, #tpu.memory_space<vmem>>, %arg4: memref<1x128xf32, #tpu.memory_space<vmem>>, %arg5: memref<128x128xbf16, #tpu.memory_space<vmem>>, %arg6: memref<1x128xf32, #tpu.memory_space<vmem>>, %arg7: memref<16x128xf32, #tpu.memory_space<vmem>>) attributes {dimension_semantics = [#tpu.dimension_semantics<parallel>, #tpu.dimension_semantics<arbitrary>], iteration_bounds = array<i64: 1, 1>, scalar_prefetch = 0 : i64, scratch_operands = 0 : i64, tpu.core_type = #tpu.core_type<tc>, window_params = [{transform_indices = @transform_0, window_bounds = array<i64: 16, 128>}, {pipeline_mode = #tpu.pipeline_mode<synchronous>, transform_indices = @transform_1, window_bounds = array<i64: 128, 128>}, {pipeline_mode = #tpu.pipeline_mode<synchronous>, transform_indices = @transform_2, window_bounds = array<i64: 1, 128>}, {pipeline_mode = #tpu.pipeline_mode<synchronous>, transform_indices = @transform_3, window_bounds = array<i64: 128, 128>}, {pipeline_mode = #tpu.pipeline_mode<synchronous>, transform_indices = @transform_4, window_bounds = array<i64: 1, 128>}, {transform_indices = @transform_5, window_bounds = array<i64: 16, 128>}]} {
    %c128_i32 = arith.constant 128 : i32
    %0 = arith.muli %arg1, %c128_i32 : i32
    %1 = tpu.assume_multiple %0, 128 : i32
    %c0 = arith.constant 0 : index
    %2 = arith.index_cast %1 : i32 to index
    %3 = vector.load %arg3[%c0, %2] : memref<128x128xbf16, #tpu.memory_space<vmem>>, vector<128x128xbf16>
    %c0_0 = arith.constant 0 : index
    %4 = arith.index_cast %1 : i32 to index
    %5 = vector.load %arg4[%c0_0, %4] : memref<1x128xf32, #tpu.memory_space<vmem>>, vector<1x128xf32>
    %6 = arith.index_cast %1 : i32 to index
    %c0_1 = arith.constant 0 : index
    %7 = vector.load %arg5[%6, %c0_1] : memref<128x128xbf16, #tpu.memory_space<vmem>>, vector<128x128xbf16>
    %c0_2 = arith.constant 0 : index
    %c0_3 = arith.constant 0 : index
    %8 = vector.load %arg2[%c0_2, %c0_3] : memref<16x128xf32, #tpu.memory_space<vmem>>, vector<16x128xf32>
    %9 = arith.truncf %8 : vector<16x128xf32> to vector<16x128xbf16>
    %cst = arith.constant dense<0.000000e+00> : vector<16x128xf32>
    %10 = tpu.matmul %9, %3, %cst {dimension_numbers = #tpu.dot_dimension_numbers<[1], [0], [0], [1], [0, 0, 1, 1], [], []>} : vector<16x128xbf16>, vector<128x128xbf16>, vector<16x128xf32> -> vector<16x128xf32>
    %11 = vector.broadcast %5 : vector<1x128xf32> to vector<16x128xf32>
    %12 = arith.addf %10, %11 : vector<16x128xf32>
    %cst_4 = arith.constant 0.797884583 : f32
    %13 = vector.broadcast %cst_4 : f32 to vector<16x128xf32>
    %14 = arith.mulf %13, %12 : vector<16x128xf32>
    %15 = arith.mulf %12, %12 : vector<16x128xf32>
    %cst_5 = arith.constant 4.471500e-02 : f32
    %16 = vector.broadcast %cst_5 : f32 to vector<16x128xf32>
    %17 = arith.mulf %16, %15 : vector<16x128xf32>
    %cst_6 = arith.constant 1.000000e+00 : f32
    %18 = vector.broadcast %cst_6 : f32 to vector<16x128xf32>
    %19 = arith.addf %18, %17 : vector<16x128xf32>
    %20 = arith.mulf %14, %19 : vector<16x128xf32>
    %cst_7 = arith.constant 5.000000e-01 : f32
    %21 = vector.broadcast %cst_7 : f32 to vector<16x128xf32>
    %22 = arith.mulf %21, %12 : vector<16x128xf32>
    %23 = math.tanh %20 : vector<16x128xf32>
    %cst_8 = arith.constant 1.000000e+00 : f32
    %24 = vector.broadcast %cst_8 : f32 to vector<16x128xf32>
    %25 = arith.addf %24, %23 : vector<16x128xf32>
    %26 = arith.mulf %22, %25 : vector<16x128xf32>
    %27 = arith.truncf %26 : vector<16x128xf32> to vector<16x128xbf16>
    %cst_9 = arith.constant dense<0.000000e+00> : vector<16x128xf32>
    %28 = tpu.matmul %27, %7, %cst_9 {dimension_numbers = #tpu.dot_dimension_numbers<[1], [0], [0], [1], [0, 0, 1, 1], [], []>} : vector<16x128xbf16>, vector<128x128xbf16>, vector<16x128xf32> -> vector<16x128xf32>
    %c0_10 = arith.constant 0 : index
    %c0_11 = arith.constant 0 : index
    %29 = vector.load %arg6[%c0_10, %c0_11] : memref<1x128xf32, #tpu.memory_space<vmem>>, vector<1x128xf32>
    %30 = vector.broadcast %29 : vector<1x128xf32> to vector<16x128xf32>
    %31 = arith.addf %28, %30 : vector<16x128xf32>
    %c0_12 = arith.constant 0 : index
    %c0_13 = arith.constant 0 : index
    %32 = vector.load %arg7[%c0_12, %c0_13] : memref<16x128xf32, #tpu.memory_space<vmem>>, vector<16x128xf32>
    tpu.vector_store %arg7[%c0_12, %c0_13], %31 {strides = array<i32>} : memref<16x128xf32, #tpu.memory_space<vmem>>, vector<16x128xf32>,
    return
  }
  func.func @transform_0(%arg0: i32, %arg1: i32) -> (i32, i32) {
    %c0_i32 = arith.constant 0 : i32
    %c0_i32_0 = arith.constant 0 : i32
    return %arg0, %c0_i32 : i32, i32
  }
  func.func @transform_1(%arg0: i32, %arg1: i32) -> (i32, i32) {
    %c0_i32 = arith.constant 0 : i32
    %c0_i32_0 = arith.constant 0 : i32
    %c0_i32_1 = arith.constant 0 : i32
    return %c0_i32, %c0_i32_0 : i32, i32
  }
  func.func @transform_2(%arg0: i32, %arg1: i32) -> (i32, i32) {
    %c0_i32 = arith.constant 0 : i32
    %c0_i32_0 = arith.constant 0 : i32
    %c0_i32_1 = arith.constant 0 : i32
    return %c0_i32, %c0_i32_0 : i32, i32
  }
  func.func @transform_3(%arg0: i32, %arg1: i32) -> (i32, i32) {
    %c0_i32 = arith.constant 0 : i32
    %c0_i32_0 = arith.constant 0 : i32
    %c0_i32_1 = arith.constant 0 : i32
    return %c0_i32, %c0_i32_0 : i32, i32
  }
  func.func @transform_4(%arg0: i32, %arg1: i32) -> (i32, i32) {
    %c0_i32 = arith.constant 0 : i32
    %c0_i32_0 = arith.constant 0 : i32
    %c0_i32_1 = arith.constant 0 : i32
    return %c0_i32, %c0_i32_0 : i32, i32
  }
  func.func @transform_5(%arg0: i32, %arg1: i32) -> (i32, i32) {
    %c0_i32 = arith.constant 0 : i32
    %c0_i32_0 = arith.constant 0 : i32
    return %arg0, %c0_i32 : i32, i32
  }
}

</mosaic_0001>

<llo_original>
// kernel: tpu_custom_call.1
$region0: #{tpu_custom_call.1}
  #allocation0 [shape = 'u32[]', space=smem, size = 0x4, offset = 0x4, fixed_abs, tag = 'smem constant byte address 0x4 - core index']
  #allocation1 [shape = 'u32[144,128]{1,0:T(1,128)}', space=vmem, size = 0x12000, scoped, tag = 'internal scratch']
  %s0 = inlined_call_operand.hbm [shape: f32[16,128], index: 0, kind: input, shape index: {}]
  %s1 = inlined_call_operand.hbm [shape: bf16[128,128], index: 1, kind: input, shape index: {}]
  %s2 = inlined_call_operand.vmem [shape: f32[1,128], index: 2, kind: input, shape index: {}]
  %s3 = inlined_call_operand.hbm [shape: bf16[128,128], index: 3, kind: input, shape index: {}]
  %s4 = inlined_call_operand.vmem [shape: f32[1,128], index: 4, kind: input, shape index: {}]
  %s5 = inlined_call_operand.hbm [shape: f32[16,128], index: 5, kind: output, shape index: {}]
  %s6 = sld [smem:[#allocation0]]
  $region42: #{tpu_custom_call.1} parent=0
    _
  %s8 = ssub.s32 1, %s6
  %s9 = scalar_select 0, %s8, %s6
  $region1: #{tpu_custom_call.1} parent=0
    #allocation2 [shape = 'u8[8192]{0}', space=vmem, size = 0x2000, scoped, tag = 'input window, operand 0, single buffered']
    #allocation3 [shape = 's32[1]{0}', space=sflag, size = 0x4, scoped, tag = 'scoped memory for tpu_custom_call.1']
    #allocation4 [shape = 's32[1]{0}', space=sflag, size = 0x4, scoped, tag = 'scoped memory for tpu_custom_call.1']
    #allocation5 [shape = 'u8[32768]{0}', space=vmem, size = 0x8000, scoped, tag = 'input window, operand 1, single buffered']
    #allocation6 [shape = 's32[1]{0}', space=sflag, size = 0x4, scoped, tag = 'scoped memory for tpu_custom_call.1']
    #allocation7 [shape = 'u8[32768]{0}', space=vmem, size = 0x8000, scoped, tag = 'input window, operand 3, single buffered']
    #allocation8 [shape = 'u8[8192]{0}', space=vmem, size = 0x2000, scoped, tag = 'output window, operand 0, single buffered']
    %10 = vsyncpa [#allocation3], 0
    %11 = vsyncpa [#allocation6], 0
    %12 = vsyncpa [#allocation4], 0
    // Predicated region
    $region2: #{tpu_custom_call.1} parent=1 // pred_check
      _
    $region3: #{tpu_custom_call.1} parent=1 // pred_check_branch
      %14 = sbr.rel (0) target = $region5
    $region4: #{tpu_custom_call.1} parent=1 // pred_region
      %s16 = ssub.s32 256, 256
      %17 = vsyncadd [#allocation3], %s16
      %s18 = sshll.u32 [#allocation2], 4
      %s19 = int_to_ptr.vmem [resolvable:$true] %s18
      %24 = dma.hbm_to_vmem [thread:$0]  %s0, 256, %s19, [#allocation3], 128, 128, 8
    $region5: #{tpu_custom_call.1} parent=1 // pred_fallthru
      _
    // Predicated region
    $region6: #{tpu_custom_call.1} parent=1 // pred_check
      _
    $region7: #{tpu_custom_call.1} parent=1 // pred_check_branch
      %26 = sbr.rel (0) target = $region9
    $region8: #{tpu_custom_call.1} parent=1 // pred_region
      %s28 = ssub.s32 1024, 1024
      %29 = vsyncadd [#allocation6], %s28
      %s30 = sshll.u32 [#allocation5], 4
      %s31 = int_to_ptr.vmem [resolvable:$true] %s30
      %36 = dma.hbm_to_vmem [thread:$0]  %s1, 1024, %s31, [#allocation6], 64, 64, 4
    $region9: #{tpu_custom_call.1} parent=1 // pred_fallthru
      _
    // Predicated region
    $region10: #{tpu_custom_call.1} parent=1 // pred_check
      _
    $region11: #{tpu_custom_call.1} parent=1 // pred_check_branch
      %38 = sbr.rel (0) target = $region13
    $region12: #{tpu_custom_call.1} parent=1 // pred_region
      _
    $region13: #{tpu_custom_call.1} parent=1 // pred_fallthru
      _
    // Predicated region
    $region14: #{tpu_custom_call.1} parent=1 // pred_check
      _
    $region15: #{tpu_custom_call.1} parent=1 // pred_check_branch
      %40 = sbr.rel (0) target = $region17
    $region16: #{tpu_custom_call.1} parent=1 // pred_region
      %s42 = ssub.s32 1024, 1024
      %43 = vsyncadd [#allocation6], %s42
      %s44 = sshll.u32 [#allocation7], 4
      %s45 = int_to_ptr.vmem [resolvable:$true] %s44
      %50 = dma.hbm_to_vmem [thread:$0]  %s3, 1024, %s45, [#allocation6], 64, 64, 4
    $region17: #{tpu_custom_call.1} parent=1 // pred_fallthru
      _
    // Predicated region
    $region18: #{tpu_custom_call.1} parent=1 // pred_check
      _
    $region19: #{tpu_custom_call.1} parent=1 // pred_check_branch
      %52 = sbr.rel (0) target = $region21
    $region20: #{tpu_custom_call.1} parent=1 // pred_region
      _
    $region21: #{tpu_custom_call.1} parent=1 // pred_fallthru
      _
    // Predicated region
    $region22: #{tpu_custom_call.1} parent=1 // pred_check
      _
    $region23: #{tpu_custom_call.1} parent=1 // pred_check_branch
      %54 = sbr.rel (0) target = $region25
    $region24: #{tpu_custom_call.1} parent=1 // pred_region
      %55 = dma.done [#allocation3], 256
    $region25: #{tpu_custom_call.1} parent=1 // pred_fallthru
      _
    // Predicated region
    $region26: #{tpu_custom_call.1} parent=1 // pred_check
      _
    $region27: #{tpu_custom_call.1} parent=1 // pred_check_branch
      %57 = sbr.rel (0) target = $region29
    $region28: #{tpu_custom_call.1} parent=1 // pred_region
      %58 = dma.done [#allocation6], 1024
    $region29: #{tpu_custom_call.1} parent=1 // pred_fallthru
      _
    // Predicated region
    $region30: #{tpu_custom_call.1} parent=1 // pred_check
      _
    $region31: #{tpu_custom_call.1} parent=1 // pred_check_branch
      %60 = sbr.rel (0) target = $region33
    $region32: #{tpu_custom_call.1} parent=1 // pred_region
      %61 = dma.done [#allocation6], 1024
    $region33: #{tpu_custom_call.1} parent=1 // pred_fallthru
      _
    %s63 = smul.u32 0, 128
    %s64 = sshra.s32 %s63, 7
    %s65 = sand.u32 %s63, 127
    %s66 = smul.addr %s64, 4
    %s67 = scalar_lea.vmem [#allocation5], %s66
    %v68 = vld [vmem:[%s67] sm:$0xf]
    %v69 = vld [vmem:[%s67 + $0x4] sm:$0xf]
    %v70 = vld [vmem:[%s67 + $0x8] sm:$0xf]
    %v71 = vld [vmem:[%s67 + $0xc] sm:$0xf]
    %v72 = vld [vmem:[%s67 + $0x10] sm:$0xf]
    %v73 = vld [vmem:[%s67 + $0x14] sm:$0xf]
    %v74 = vld [vmem:[%s67 + $0x18] sm:$0xf]
    %v75 = vld [vmem:[%s67 + $0x1c] sm:$0xf]
    %v76 = vld [vmem:[%s67 + $0x20] sm:$0xf]
    %v77 = vld [vmem:[%s67 + $0x24] sm:$0xf]
    %v78 = vld [vmem:[%s67 + $0x28] sm:$0xf]
    %v79 = vld [vmem:[%s67 + $0x2c] sm:$0xf]
    %v80 = vld [vmem:[%s67 + $0x30] sm:$0xf]
    %v81 = vld [vmem:[%s67 + $0x34] sm:$0xf]
    %v82 = vld [vmem:[%s67 + $0x38] sm:$0xf]
    %v83 = vld [vmem:[%s67 + $0x3c] sm:$0xf]
    %s84 = scalar_lea.vmem %s2, %s64
    %v85 = vld [vmem:[%s84] sm:$0x1]
    %s86 = sshra.s32 %s63, 3
    %s87 = sand.u32 %s63, 7
    %s88 = smul.addr %s86, 4
    %s89 = scalar_lea.vmem [#allocation7], %s88
    %v90 = vld [vmem:[%s89] sm:$0xf]
    %v91 = vld [vmem:[%s89 + $0x4] sm:$0xf]
    %v92 = vld [vmem:[%s89 + $0x8] sm:$0xf]
    %v93 = vld [vmem:[%s89 + $0xc] sm:$0xf]
    %v94 = vld [vmem:[%s89 + $0x10] sm:$0xf]
    %v95 = vld [vmem:[%s89 + $0x14] sm:$0xf]
    %v96 = vld [vmem:[%s89 + $0x18] sm:$0xf]
    %v97 = vld [vmem:[%s89 + $0x1c] sm:$0xf]
    %v98 = vld [vmem:[%s89 + $0x20] sm:$0xf]
    %v99 = vld [vmem:[%s89 + $0x24] sm:$0xf]
    %v100 = vld [vmem:[%s89 + $0x28] sm:$0xf]
    %v101 = vld [vmem:[%s89 + $0x2c] sm:$0xf]
    %v102 = vld [vmem:[%s89 + $0x30] sm:$0xf]
    %v103 = vld [vmem:[%s89 + $0x34] sm:$0xf]
    %v104 = vld [vmem:[%s89 + $0x38] sm:$0xf]
    %v105 = vld [vmem:[%s89 + $0x3c] sm:$0xf]
    %v106 = vld [vmem:[#allocation2] sm:$0xff]
    %v107 = vld [vmem:[#allocation2 + $0x8] sm:$0xff]
    %v108 = vpack.c.bf16 %v107, %v106
    %v110 = vlaneseq
    %v111 = vshrl.u32 %v110, 7
    %v112 = vsub.s32 0, %v111
    %v113 = vrot.slane %v85, %v112
    %v131 = vunpack.c.l.b16 %v68
    %v132 = vunpack.c.l.b16 %v69
    %v133 = vunpack.c.l.b16 %v70
    %v134 = vunpack.c.l.b16 %v71
    %v135 = vunpack.c.l.b16 %v72
    %v136 = vunpack.c.l.b16 %v73
    %v137 = vunpack.c.l.b16 %v74
    %v138 = vunpack.c.l.b16 %v75
    %v139 = vunpack.c.l.b16 %v76
    %v140 = vunpack.c.l.b16 %v77
    %v141 = vunpack.c.l.b16 %v78
    %v142 = vunpack.c.l.b16 %v79
    %v143 = vunpack.c.l.b16 %v80
    %v144 = vunpack.c.l.b16 %v81
    %v145 = vunpack.c.l.b16 %v82
    %v146 = vunpack.c.l.b16 %v83
    %v147 = vpack.c.b16 %v132, %v131
    %v148 = vpack.c.b16 %v134, %v133
    %v149 = vpack.c.b16 %v136, %v135
    %v150 = vpack.c.b16 %v138, %v137
    %v151 = vpack.c.b16 %v140, %v139
    %v152 = vpack.c.b16 %v142, %v141
    %v153 = vpack.c.b16 %v144, %v143
    %v154 = vpack.c.b16 %v146, %v145
    %163 = vmatprep.subr.bf16.mxu0 0
    %164 = vmatpush1.bf16.msra.mxu0 %v147
    %165 = vmatprep.subr.bf16.mxu0 0
    %166 = vmatpush1.bf16.msra.mxu0 %v148
    %167 = vmatprep.subr.bf16.mxu0 0
    %168 = vmatpush1.bf16.msra.mxu0 %v149
    %169 = vmatprep.subr.bf16.mxu0 0
    %170 = vmatpush1.bf16.msra.mxu0 %v150
    %171 = vmatprep.subr.bf16.mxu0 0
    %172 = vmatpush1.bf16.msra.mxu0 %v151
    %173 = vmatprep.subr.bf16.mxu0 0
    %174 = vmatpush1.bf16.msra.mxu0 %v152
    %175 = vmatprep.subr.bf16.mxu0 0
    %176 = vmatpush1.bf16.msra.mxu0 %v153
    %177 = vmatprep.subr.bf16.mxu0 0
    %178 = vmatpush1.bf16.msra.mxu0 %v154
    %179 = vmatprep.subr.bf16.mxu0 0
    %180 = vmatpush1.bf16.msra.mxu0 0
    %181 = vmatprep.subr.bf16.mxu0 0
    %182 = vmatpush1.bf16.msra.mxu0 0
    %183 = vmatprep.subr.bf16.mxu0 0
    %184 = vmatpush1.bf16.msra.mxu0 0
    %185 = vmatprep.subr.bf16.mxu0 0
    %186 = vmatpush1.bf16.msra.mxu0 0
    %187 = vmatprep.subr.bf16.mxu0 0
    %188 = vmatpush1.bf16.msra.mxu0 0
    %189 = vmatprep.subr.bf16.mxu0 0
    %190 = vmatpush1.bf16.msra.mxu0 0
    %191 = vmatprep.subr.bf16.mxu0 0
    %192 = vmatpush1.bf16.msra.mxu0 0
    %193 = vmatprep.subr.bf16.mxu0 0
    %194 = vmatpush1.bf16.msra.mxu0 0
    %195 = vmatprep.mubr.bf16.mxu0 0
    %196 = vmatmul.mubr.bf16.gmra.mrb[0].mxu0 %v108
    %v197 = vpop.f32.mrb[0].mxu0
    %v198 = vadd.f32 %v113, %v197
    %v199 = vpop.f32.mrb[0].mxu0
    %v200 = vpop.f32.mrb[0].mxu0
    %v201 = vadd.f32 %v113, %v200
    %v202 = vpop.f32.mrb[0].mxu0
    %203 = vdwg.mxu0
    %v204 = vmul.f32 %v198, 0.7978846
    %v205 = vmul.f32 %v201, 0.7978846
    %v206 = vmul.f32 %v198, %v198
    %v207 = vmul.f32 %v201, %v201
    %v208 = vmul.f32 %v206, 0.044715
    %v209 = vmul.f32 %v207, 0.044715
    %v210 = vadd.f32 %v208, 1.0
    %v211 = vadd.f32 %v209, 1.0
    %v212 = vmul.f32 %v204, %v210
    %v213 = vmul.f32 %v205, %v211
    %v214 = vmul.f32 %v198, 0.5
    %v215 = vmul.f32 %v201, 0.5
    %v216 = vtanh.pop %v212
    %v217 = vtanh.pop %v213
    %v218 = vadd.f32 %v216, 1.0
    %v219 = vadd.f32 %v217, 1.0
    %v220 = vmul.f32 %v214, %v218
    %v221 = vmul.f32 %v215, %v219
    %v222 = vpack.c.bf16 %v221, %v220
    %v223 = vld [vmem:[%s4] sm:$0x1]
    %v225 = vlaneseq
    %v226 = vshrl.u32 %v225, 7
    %v227 = vsub.s32 0, %v226
    %v228 = vrot.slane %v223, %v227
    %v246 = vunpack.c.l.b16 %v90
    %v247 = vunpack.c.l.b16 %v91
    %v248 = vunpack.c.l.b16 %v92
    %v249 = vunpack.c.l.b16 %v93
    %v250 = vunpack.c.l.b16 %v94
    %v251 = vunpack.c.l.b16 %v95
    %v252 = vunpack.c.l.b16 %v96
    %v253 = vunpack.c.l.b16 %v97
    %v254 = vunpack.c.l.b16 %v98
    %v255 = vunpack.c.l.b16 %v99
    %v256 = vunpack.c.l.b16 %v100
    %v257 = vunpack.c.l.b16 %v101
    %v258 = vunpack.c.l.b16 %v102
    %v259 = vunpack.c.l.b16 %v103
    %v260 = vunpack.c.l.b16 %v104
    %v261 = vunpack.c.l.b16 %v105
    %v262 = vpack.c.b16 %v247, %v246
    %v263 = vpack.c.b16 %v249, %v248
    %v264 = vpack.c.b16 %v251, %v250
    %v265 = vpack.c.b16 %v253, %v252
    %v266 = vpack.c.b16 %v255, %v254
    %v267 = vpack.c.b16 %v257, %v256
    %v268 = vpack.c.b16 %v259, %v258
    %v269 = vpack.c.b16 %v261, %v260
    %278 = vmatprep.subr.bf16.mxu0 0
    %279 = vmatpush1.bf16.msra.mxu0 %v262
    %280 = vmatprep.subr.bf16.mxu0 0
    %281 = vmatpush1.bf16.msra.mxu0 %v263
    %282 = vmatprep.subr.bf16.mxu0 0
    %283 = vmatpush1.bf16.msra.mxu0 %v264
    %284 = vmatprep.subr.bf16.mxu0 0
    %285 = vmatpush1.bf16.msra.mxu0 %v265
    %286 = vmatprep.subr.bf16.mxu0 0
    %287 = vmatpush1.bf16.msra.mxu0 %v266
    %288 = vmatprep.subr.bf16.mxu0 0
    %289 = vmatpush1.bf16.msra.mxu0 %v267
    %290 = vmatprep.subr.bf16.mxu0 0
    %291 = vmatpush1.bf16.msra.mxu0 %v268
    %292 = vmatprep.subr.bf16.mxu0 0
    %293 = vmatpush1.bf16.msra.mxu0 %v269
    %294 = vmatprep.subr.bf16.mxu0 0
    %295 = vmatpush1.bf16.msra.mxu0 0
    %296 = vmatprep.subr.bf16.mxu0 0
    %297 = vmatpush1.bf16.msra.mxu0 0
    %298 = vmatprep.subr.bf16.mxu0 0
    %299 = vmatpush1.bf16.msra.mxu0 0
    %300 = vmatprep.subr.bf16.mxu0 0
    %301 = vmatpush1.bf16.msra.mxu0 0
    %302 = vmatprep.subr.bf16.mxu0 0
    %303 = vmatpush1.bf16.msra.mxu0 0
    %304 = vmatprep.subr.bf16.mxu0 0
    %305 = vmatpush1.bf16.msra.mxu0 0
    %306 = vmatprep.subr.bf16.mxu0 0
    %307 = vmatpush1.bf16.msra.mxu0 0
    %308 = vmatprep.subr.bf16.mxu0 0
    %309 = vmatpush1.bf16.msra.mxu0 0
    %310 = vmatprep.mubr.bf16.mxu0 0
    %311 = vmatmul.mubr.bf16.gmra.mrb[0].mxu0 %v222
    %v312 = vpop.f32.mrb[0].mxu0
    %v313 = vadd.f32 %v228, %v312
    %v314 = vpop.f32.mrb[0].mxu0
    %v315 = vpop.f32.mrb[0].mxu0
    %v316 = vadd.f32 %v228, %v315
    %v317 = vpop.f32.mrb[0].mxu0
    %318 = vdwg.mxu0
    %319 = vst [vmem:[#allocation8] sm:$0xff] %v313
    %320 = vst [vmem:[#allocation8 + $0x8] sm:$0xff] %v316
    // Predicated region
    $region34: #{tpu_custom_call.1} parent=1 // pred_check
      _
    $region35: #{tpu_custom_call.1} parent=1 // pred_check_branch
      %322 = sbr.rel (0) target = $region37
    $region36: #{tpu_custom_call.1} parent=1 // pred_region
      %s324 = ssub.s32 256, 256
      %325 = vsyncadd [#allocation4], %s324
      %s326 = sshll.u32 [#allocation8], 4
      %s327 = int_to_ptr.vmem [resolvable:$true] %s326
      %332 = dma.vmem_to_hbm [thread:$0]  %s327, 256, %s5, [#allocation4], 128, 128, 8
    $region37: #{tpu_custom_call.1} parent=1 // pred_fallthru
      _
    // Predicated region
    $region38: #{tpu_custom_call.1} parent=1 // pred_check
      _
    $region39: #{tpu_custom_call.1} parent=1 // pred_check_branch
      %334 = sbr.rel (0) target = $region41
    $region40: #{tpu_custom_call.1} parent=1 // pred_region
      %335 = dma.done [#allocation4], 256
    $region41: #{tpu_custom_call.1} parent=1 // pred_fallthru
      _
    %336 = vsyncpa [#allocation3], 1
    %337 = vsyncpa [#allocation6], 1
    %338 = vsyncpa [#allocation4], 1

</llo_original>
